<compile_context>
chip_gen: v6e
topology: v6e:2x2x1
jax: 0.10.0
libtpu: 0.0.40
codegen_flags: <defaults>
</compile_context>

<pallas_src>
import functools
import math

import jax
import jax.numpy as jnp
from jax.experimental import pallas as pl
from jax.experimental.pallas import tpu as pltpu


def _round_up(x: int, m: int) -> int:
    return ((x + m - 1) // m) * m


# ---------------------------------------------------------------------------
# Failure-safe runtime probes (feature / generation detection).
# ---------------------------------------------------------------------------
@functools.lru_cache(maxsize=1)
def _buffered_one_supported() -> bool:
    """True iff BlockSpec(pipeline_mode=pl.Buffered(1)) compiles and runs."""
    def _copy(x_ref, o_ref):
        o_ref[...] = x_ref[...]
    try:
        fn = pl.pallas_call(
            _copy,
            out_shape=jax.ShapeDtypeStruct((8, 128), jnp.float32),
            grid=(2,),
            in_specs=[pl.BlockSpec((8, 128), lambda i: (0, 0),
                                   pipeline_mode=pl.Buffered(1))],
            out_specs=pl.BlockSpec((8, 128), lambda i: (0, 0)),
        )
        jax.block_until_ready(fn(jnp.zeros((8, 128), jnp.float32)))
        return True
    except Exception:
        return False


@functools.lru_cache(maxsize=1)
def _default_tile_b() -> int:
    # v5e: 128x128 MXUs and a single vector-store slot -> tile_b=128 halves the
    # (tile_b, 3*Hp) f32 gate intermediates / epilogue pressure at no MXU cost.
    try:
        kind = jax.devices()[0].device_kind.lower()
        if "v5 lite" in kind or "v5e" in kind or "v5lite" in kind:
            return 128
    except Exception:
        pass
    return 256


@functools.lru_cache(maxsize=1)
def _vmem_cap_bytes() -> int:
    # ~85% of physical VMEM: ~54 MiB on v7x (64 MiB/TC), ~108 MiB on v5e/v6e
    # (128 MiB), leaving headroom for compiler-internal scratch.
    try:
        phys = int(pltpu.get_tpu_info().vmem_capacity_bytes)
        return max(int(phys * 0.85), 16 << 20)
    except Exception:
        return 64 << 20  # conservative fallback, safe on every generation


# ---------------------------------------------------------------------------
# Kernel
# ---------------------------------------------------------------------------
def _gru_cell_kernel(x_ref, h_ref, wx_ref, wh_ref, bx_ref, bh_ref, out_ref, *,
                     hp: int):
    # Two dense MXU matmuls (no zero-padded gate blocks), f32 accumulation.
    gx = jnp.dot(x_ref[...], wx_ref[...], preferred_element_type=jnp.float32)
    gx = gx + bx_ref[...]                                   # (tile_b, 3*Hp) f32

    h32 = h_ref[...].astype(jnp.float32)                    # exact h for blending
    gh = jnp.dot(h_ref[...].astype(wh_ref.dtype), wh_ref[...],
                 preferred_element_type=jnp.float32)
    gh = gh + bh_ref[...]                                   # (tile_b, 3*Hp) f32

    # Gate slices start at multiples of Hp (multiple of 128) -> lane-aligned.
    resetgate = jax.nn.sigmoid(gx[:, 0 * hp:1 * hp] + gh[:, 0 * hp:1 * hp])
    inputgate = jax.nn.sigmoid(gx[:, 1 * hp:2 * hp] + gh[:, 1 * hp:2 * hp])
    newgate = jnp.tanh(gx[:, 2 * hp:3 * hp] + resetgate * gh[:, 2 * hp:3 * hp])

    hy = newgate + inputgate * (h32 - newgate)
    out_ref[...] = hy.astype(out_ref.dtype)


# ---------------------------------------------------------------------------
# Parameter preparation (call ONCE at model init, not per timestep).
# ---------------------------------------------------------------------------
def prepare_gru_params(wx, bx, wh, bh, *, param_dtype=jnp.bfloat16):
    """Repack PyTorch-layout GRUCell weights into lane-aligned dense matrices.

    wx: (3H, I), bx: (3H,), wh: (3H, H), bh: (3H,)  (nn.Linear layouts).
    Returns (Wx3 (Ip, 3*Hp), Wh3 (Hp, 3*Hp)) in param_dtype plus f32 bias rows
    (1, 3*Hp) each, and meta=(I, H, Ip, Hp).  bf16 storage (default) halves
    weight HBM traffic; the matmuls still accumulate in f32.
    """
    three_h, I = wx.shape
    H = three_h // 3
    Ip = _round_up(max(I, 1), 128)
    Hp = _round_up(max(H, 1), 128)

    wx = wx.astype(jnp.float32)
    wh = wh.astype(jnp.float32)
    bx = bx.astype(jnp.float32)
    bh = bh.astype(jnp.float32)

    wx3 = jnp.zeros((Ip, 3 * Hp), jnp.float32)
    wh3 = jnp.zeros((Hp, 3 * Hp), jnp.float32)
    bx3 = jnp.zeros((1, 3 * Hp), jnp.float32)
    bh3 = jnp.zeros((1, 3 * Hp), jnp.float32)
    for g in range(3):                       # PyTorch gate order: r, i(update), n
        wx3 = wx3.at[:I, g * Hp:g * Hp + H].set(wx[g * H:(g + 1) * H].T)
        wh3 = wh3.at[:H, g * Hp:g * Hp + H].set(wh[g * H:(g + 1) * H].T)
        bx3 = bx3.at[0, g * Hp:g * Hp + H].set(bx[g * H:(g + 1) * H])
        bh3 = bh3.at[0, g * Hp:g * Hp + H].set(bh[g * H:(g + 1) * H])

    meta = (I, H, Ip, Hp)
    return wx3.astype(param_dtype), wh3.astype(param_dtype), bx3, bh3, meta


# ---------------------------------------------------------------------------
# Wrapper
# ---------------------------------------------------------------------------
@functools.partial(jax.jit, static_argnames=("meta", "tile_b", "single_buf"))
def _gru_cell_impl(x, hidden, wx3, wh3, bx3, bh3, *, meta, tile_b, single_buf):
    I, H, Ip, Hp = meta
    B = x.shape[0]
    Bp = _round_up(_round_up(B, 8), tile_b)
    grid = (Bp // tile_b,)

    act_dtype = wx3.dtype   # stream x in the weight dtype (halves x DMA in bf16)
    x_pad = jnp.zeros((Bp, Ip), act_dtype).at[:B, :I].set(x.astype(act_dtype))
    # Hidden stays f32: exact final interpolation and no bf16 drift when hy is
    # fed back as the next step's hidden state.
    h_pad = jnp.zeros((Bp, Hp), jnp.float32).at[:B, :H].set(
        hidden.astype(jnp.float32))

    # Explicit VMEM budget: resident weights (+bias) + pipelined activation
    # tiles + f32 gate temporaries + fixed headroom, capped per-generation.
    itm_w = jnp.dtype(wx3.dtype).itemsize
    itm_x = jnp.dtype(act_dtype).itemsize
    itm_o = jnp.dtype(hidden.dtype).itemsize
    w_bufs = 1 if single_buf else 2
    est = (w_bufs * ((Ip + Hp) * 3 * Hp * itm_w + 2 * 3 * Hp * 4)
           + 2 * tile_b * (Ip * itm_x + Hp * 4 + Hp * itm_o)
           + 2 * tile_b * 3 * Hp * 4
           + (4 << 20))
    vmem_limit = int(min(max(est, 32 << 20), _vmem_cap_bytes()))

    const_kw = {"pipeline_mode": pl.Buffered(1)} if single_buf else {}
    in_specs = [
        pl.BlockSpec((tile_b, Ip), lambda b: (b, 0)),            # x batch tile
        pl.BlockSpec((tile_b, Hp), lambda b: (b, 0)),            # h batch tile
        pl.BlockSpec((Ip, 3 * Hp), lambda b: (0, 0), **const_kw),  # Wx3 resident
        pl.BlockSpec((Hp, 3 * Hp), lambda b: (0, 0), **const_kw),  # Wh3 resident
        pl.BlockSpec((1, 3 * Hp), lambda b: (0, 0), **const_kw),   # bx3
        pl.BlockSpec((1, 3 * Hp), lambda b: (0, 0), **const_kw),   # bh3
    ]

    out = pl.pallas_call(
        functools.partial(_gru_cell_kernel, hp=Hp),
        out_shape=jax.ShapeDtypeStruct((Bp, Hp), hidden.dtype),
        grid=grid,
        in_specs=in_specs,
        out_specs=pl.BlockSpec((tile_b, Hp), lambda b: (b, 0)),
        compiler_params=pltpu.CompilerParams(
            dimension_semantics=("parallel",),
            vmem_limit_bytes=vmem_limit,
        ),
    )(x_pad, h_pad, wx3, wh3, bx3, bh3)

    return out[:B, :H]


def gru_cell(x, hidden, wx3, wh3, bx3, bh3, meta, *, tile_b=None):
    """x: (B, I), hidden: (B, H); params from prepare_gru_params. Returns hy."""
    if tile_b is None:
        tile_b = _default_tile_b()
    B = x.shape[0]
    Bp8 = _round_up(B, 8)
    if Bp8 <= tile_b:
        # Small batch: weight-DMA bound -> single tile (don't duplicate the
        # resident weight DMA across two cores for no compute benefit).
        tile_b = Bp8
    elif Bp8 < 2 * tile_b:
        # Large-ish batch: ensure >= 2 grid steps so both v7x TCs get work.
        tile_b = _round_up((Bp8 + 1) // 2, 8)
    return _gru_cell_impl(x, hidden, wx3, wh3, bx3, bh3,
                          meta=meta, tile_b=tile_b,
                          single_buf=_buffered_one_supported())


# ---------------------------------------------------------------------------
# Pure-JAX reference (mirrors the PyTorch module exactly).
# ---------------------------------------------------------------------------
def reference_gru(x, hidden, wx, bx, wh, bh):
    gate_x = x @ wx.T + bx
    gate_h = hidden @ wh.T + bh
    H = hidden.shape[1]
    i_r, i_i, i_n = gate_x[:, :H], gate_x[:, H:2 * H], gate_x[:, 2 * H:]
    h_r, h_i, h_n = gate_h[:, :H], gate_h[:, H:2 * H], gate_h[:, 2 * H:]
    resetgate = jax.nn.sigmoid(i_r + h_r)
    inputgate = jax.nn.sigmoid(i_i + h_i)
    newgate = jnp.tanh(i_n + resetgate * h_n)
    return newgate + inputgate * (hidden - newgate)


if __name__ == "__main__":
    B, INPUT, HIDDEN = 2, 16, 32
    std = 1.0 / math.sqrt(HIDDEN)

    key = jax.random.PRNGKey(0)
    kx, kh, k1, k2, k3, k4 = jax.random.split(key, 6)

    x = jax.random.normal(kx, (B, INPUT), dtype=jnp.float32)
    hidden = jax.random.normal(kh, (B, HIDDEN), dtype=jnp.float32)

    # nn.Linear-shaped params with uniform(-std, std) init, matching the module.
    wx = jax.random.uniform(k1, (3 * HIDDEN, INPUT), minval=-std, maxval=std,
                            dtype=jnp.float32)
    bx = jax.random.uniform(k2, (3 * HIDDEN,), minval=-std, maxval=std,
                            dtype=jnp.float32)
    wh = jax.random.uniform(k3, (3 * HIDDEN, HIDDEN), minval=-std, maxval=std,
                            dtype=jnp.float32)
    bh = jax.random.uniform(k4, (3 * HIDDEN,), minval=-std, maxval=std,
                            dtype=jnp.float32)

    ref = reference_gru(x, hidden, wx, bx, wh, bh)

    # f32-weight path: exact-semantics check.
    p32 = prepare_gru_params(wx, bx, wh, bh, param_dtype=jnp.float32)
    wx32, wh32, bx32, bh32, meta32 = p32
    out32 = jax.block_until_ready(
        gru_cell(x, hidden, wx32, wh32, bx32, bh32, meta=meta32))
    assert out32.shape == (B, HIDDEN)
    assert jnp.allclose(out32, ref, atol=1e-4, rtol=1e-4), "f32 mismatch vs reference"

    # Default (bf16-weight) path: halved weight HBM traffic, f32 accumulation.
    pbf = prepare_gru_params(wx, bx, wh, bh)
    wxbf, whbf, bxbf, bhbf, metabf = pbf
    outbf = jax.block_until_ready(
        gru_cell(x, hidden, wxbf, whbf, bxbf, bhbf, meta=metabf))
    assert outbf.shape == (B, HIDDEN)
    assert jnp.allclose(outbf, ref, atol=5e-2, rtol=5e-2), "bf16 mismatch vs reference"

    print("KERNEL_OK")
</pallas_src>

<mosaic_0001>
module attributes {stable_mosaic.version = 11 : i64} {
  func.func @_copy(%arg0: i32, %arg1: memref<8x128xf32, #tpu.memory_space<vmem>>, %arg2: memref<8x128xf32, #tpu.memory_space<vmem>>) attributes {dimension_semantics = [#tpu.dimension_semantics<arbitrary>], iteration_bounds = array<i64: 2>, scalar_prefetch = 0 : i64, scratch_operands = 0 : i64, tpu.core_type = #tpu.core_type<tc>, window_params = [{pipeline_mode = #tpu.pipeline_mode<synchronous>, transform_indices = @transform_0, window_bounds = array<i64: 8, 128>}, {pipeline_mode = #tpu.pipeline_mode<synchronous>, transform_indices = @transform_1, window_bounds = array<i64: 8, 128>}]} {
    %c0 = arith.constant 0 : index
    %c0_0 = arith.constant 0 : index
    %0 = vector.load %arg1[%c0, %c0_0] : memref<8x128xf32, #tpu.memory_space<vmem>>, vector<8x128xf32>
    %c0_1 = arith.constant 0 : index
    %c0_2 = arith.constant 0 : index
    %1 = vector.load %arg2[%c0_1, %c0_2] : memref<8x128xf32, #tpu.memory_space<vmem>>, vector<8x128xf32>
    tpu.vector_store %arg2[%c0_1, %c0_2], %0 {strides = array<i32>} : memref<8x128xf32, #tpu.memory_space<vmem>>, vector<8x128xf32>,
    return
  }
  func.func @transform_0(%arg0: i32) -> (i32, i32) {
    %c0_i32 = arith.constant 0 : i32
    %c0_i32_0 = arith.constant 0 : i32
    %c0_i32_1 = arith.constant 0 : i32
    return %c0_i32, %c0_i32_0 : i32, i32
  }
  func.func @transform_1(%arg0: i32) -> (i32, i32) {
    %c0_i32 = arith.constant 0 : i32
    %c0_i32_0 = arith.constant 0 : i32
    %c0_i32_1 = arith.constant 0 : i32
    return %c0_i32, %c0_i32_0 : i32, i32
  }
}

module attributes {stable_mosaic.version = 11 : i64} {
  func.func @_gru_cell_kernel(%arg0: i32, %arg1: memref<8x128xf32, #tpu.memory_space<vmem>>, %arg2: memref<8x128xf32, #tpu.memory_space<vmem>>, %arg3: memref<128x384xf32, #tpu.memory_space<vmem>>, %arg4: memref<128x384xf32, #tpu.memory_space<vmem>>, %arg5: memref<1x384xf32, #tpu.memory_space<vmem>>, %arg6: memref<1x384xf32, #tpu.memory_space<vmem>>, %arg7: memref<8x128xf32, #tpu.memory_space<vmem>>) attributes {dimension_semantics = [#tpu.dimension_semantics<parallel>], iteration_bounds = array<i64: 1>, scalar_prefetch = 0 : i64, scratch_operands = 0 : i64, tpu.core_type = #tpu.core_type<tc>, window_params = [{transform_indices = @transform_0, window_bounds = array<i64: 8, 128>}, {transform_indices = @transform_1, window_bounds = array<i64: 8, 128>}, {pipeline_mode = #tpu.pipeline_mode<synchronous>, transform_indices = @transform_2, window_bounds = array<i64: 128, 384>}, {pipeline_mode = #tpu.pipeline_mode<synchronous>, transform_indices = @transform_3, window_bounds = array<i64: 128, 384>}, {pipeline_mode = #tpu.pipeline_mode<synchronous>, transform_indices = @transform_4, window_bounds = array<i64: 1, 384>}, {pipeline_mode = #tpu.pipeline_mode<synchronous>, transform_indices = @transform_5, window_bounds = array<i64: 1, 384>}, {transform_indices = @transform_6, window_bounds = array<i64: 8, 128>}]} {
    %c0 = arith.constant 0 : index
    %c0_0 = arith.constant 0 : index
    %0 = vector.load %arg1[%c0, %c0_0] : memref<8x128xf32, #tpu.memory_space<vmem>>, vector<8x128xf32>
    %c0_1 = arith.constant 0 : index
    %c0_2 = arith.constant 0 : index
    %1 = vector.load %arg3[%c0_1, %c0_2] : memref<128x384xf32, #tpu.memory_space<vmem>>, vector<128x384xf32>
    %cst = arith.constant dense<0.000000e+00> : vector<8x384xf32>
    %2 = tpu.matmul %0, %1, %cst {dimension_numbers = #tpu.dot_dimension_numbers<[1], [0], [0], [1], [0, 0, 1, 1], [], []>} : vector<8x128xf32>, vector<128x384xf32>, vector<8x384xf32> -> vector<8x384xf32>
    %c0_3 = arith.constant 0 : index
    %c0_4 = arith.constant 0 : index
    %3 = vector.load %arg5[%c0_3, %c0_4] : memref<1x384xf32, #tpu.memory_space<vmem>>, vector<1x384xf32>
    %4 = vector.broadcast %3 : vector<1x384xf32> to vector<8x384xf32>
    %5 = arith.addf %2, %4 : vector<8x384xf32>
    %c0_5 = arith.constant 0 : index
    %c0_6 = arith.constant 0 : index
    %6 = vector.load %arg2[%c0_5, %c0_6] : memref<8x128xf32, #tpu.memory_space<vmem>>, vector<8x128xf32>
    %c0_7 = arith.constant 0 : index
    %c0_8 = arith.constant 0 : index
    %7 = vector.load %arg2[%c0_7, %c0_8] : memref<8x128xf32, #tpu.memory_space<vmem>>, vector<8x128xf32>
    %c0_9 = arith.constant 0 : index
    %c0_10 = arith.constant 0 : index
    %8 = vector.load %arg4[%c0_9, %c0_10] : memref<128x384xf32, #tpu.memory_space<vmem>>, vector<128x384xf32>
    %cst_11 = arith.constant dense<0.000000e+00> : vector<8x384xf32>
    %9 = tpu.matmul %7, %8, %cst_11 {dimension_numbers = #tpu.dot_dimension_numbers<[1], [0], [0], [1], [0, 0, 1, 1], [], []>} : vector<8x128xf32>, vector<128x384xf32>, vector<8x384xf32> -> vector<8x384xf32>
    %c0_12 = arith.constant 0 : index
    %c0_13 = arith.constant 0 : index
    %10 = vector.load %arg6[%c0_12, %c0_13] : memref<1x384xf32, #tpu.memory_space<vmem>>, vector<1x384xf32>
    %11 = vector.broadcast %10 : vector<1x384xf32> to vector<8x384xf32>
    %12 = arith.addf %9, %11 : vector<8x384xf32>
    %13 = vector.extract_strided_slice %5 {offsets = [0, 0], sizes = [8, 128], strides = [1, 1]} : vector<8x384xf32> to vector<8x128xf32>
    %14 = vector.extract_strided_slice %12 {offsets = [0, 0], sizes = [8, 128], strides = [1, 1]} : vector<8x384xf32> to vector<8x128xf32>
    %15 = arith.addf %13, %14 : vector<8x128xf32>
    %16 = arith.negf %15 : vector<8x128xf32>
    %17 = math.exp %16 : vector<8x128xf32>
    %cst_14 = arith.constant 1.000000e+00 : f32
    %18 = vector.broadcast %cst_14 : f32 to vector<8x128xf32>
    %19 = arith.addf %18, %17 : vector<8x128xf32>
    %20 = arith.divf %18, %19 : vector<8x128xf32>
    %21 = vector.extract_strided_slice %5 {offsets = [0, 128], sizes = [8, 128], strides = [1, 1]} : vector<8x384xf32> to vector<8x128xf32>
    %22 = vector.extract_strided_slice %12 {offsets = [0, 128], sizes = [8, 128], strides = [1, 1]} : vector<8x384xf32> to vector<8x128xf32>
    %23 = arith.addf %21, %22 : vector<8x128xf32>
    %24 = arith.negf %23 : vector<8x128xf32>
    %25 = math.exp %24 : vector<8x128xf32>
    %cst_15 = arith.constant 1.000000e+00 : f32
    %26 = vector.broadcast %cst_15 : f32 to vector<8x128xf32>
    %27 = arith.addf %26, %25 : vector<8x128xf32>
    %28 = arith.divf %26, %27 : vector<8x128xf32>
    %29 = vector.extract_strided_slice %5 {offsets = [0, 256], sizes = [8, 128], strides = [1, 1]} : vector<8x384xf32> to vector<8x128xf32>
    %30 = vector.extract_strided_slice %12 {offsets = [0, 256], sizes = [8, 128], strides = [1, 1]} : vector<8x384xf32> to vector<8x128xf32>
    %31 = arith.mulf %20, %30 : vector<8x128xf32>
    %32 = arith.addf %29, %31 : vector<8x128xf32>
    %33 = math.tanh %32 : vector<8x128xf32>
    %34 = arith.subf %6, %33 : vector<8x128xf32>
    %35 = arith.mulf %28, %34 : vector<8x128xf32>
    %36 = arith.addf %33, %35 : vector<8x128xf32>
    %c0_16 = arith.constant 0 : index
    %c0_17 = arith.constant 0 : index
    %37 = vector.load %arg7[%c0_16, %c0_17] : memref<8x128xf32, #tpu.memory_space<vmem>>, vector<8x128xf32>
    tpu.vector_store %arg7[%c0_16, %c0_17], %36 {strides = array<i32>} : memref<8x128xf32, #tpu.memory_space<vmem>>, vector<8x128xf32>,
    return
  }
  func.func @transform_0(%arg0: i32) -> (i32, i32) {
    %c0_i32 = arith.constant 0 : i32
    %c0_i32_0 = arith.constant 0 : i32
    return %arg0, %c0_i32 : i32, i32
  }
  func.func @transform_1(%arg0: i32) -> (i32, i32) {
    %c0_i32 = arith.constant 0 : i32
    %c0_i32_0 = arith.constant 0 : i32
    return %arg0, %c0_i32 : i32, i32
  }
  func.func @transform_2(%arg0: i32) -> (i32, i32) {
    %c0_i32 = arith.constant 0 : i32
    %c0_i32_0 = arith.constant 0 : i32
    %c0_i32_1 = arith.constant 0 : i32
    return %c0_i32, %c0_i32_0 : i32, i32
  }
  func.func @transform_3(%arg0: i32) -> (i32, i32) {
    %c0_i32 = arith.constant 0 : i32
    %c0_i32_0 = arith.constant 0 : i32
    %c0_i32_1 = arith.constant 0 : i32
    return %c0_i32, %c0_i32_0 : i32, i32
  }
  func.func @transform_4(%arg0: i32) -> (i32, i32) {
    %c0_i32 = arith.constant 0 : i32
    %c0_i32_0 = arith.constant 0 : i32
    %c0_i32_1 = arith.constant 0 : i32
    return %c0_i32, %c0_i32_0 : i32, i32
  }
  func.func @transform_5(%arg0: i32) -> (i32, i32) {
    %c0_i32 = arith.constant 0 : i32
    %c0_i32_0 = arith.constant 0 : i32
    %c0_i32_1 = arith.constant 0 : i32
    return %c0_i32, %c0_i32_0 : i32, i32
  }
  func.func @transform_6(%arg0: i32) -> (i32, i32) {
    %c0_i32 = arith.constant 0 : i32
    %c0_i32_0 = arith.constant 0 : i32
    return %arg0, %c0_i32 : i32, i32
  }
}

</mosaic_0001>

<llo_original>
// kernel: tpu_custom_call.1
$region0: #{tpu_custom_call.1}
  #allocation0 [shape = 'u32[]', space=smem, size = 0x4, offset = 0x4, fixed_abs, tag = 'smem constant byte address 0x4 - core index']
  #allocation1 [shape = 'u32[144,128]{1,0:T(1,128)}', space=vmem, size = 0x12000, scoped, tag = 'internal scratch']
  %s0 = inlined_call_operand.hbm [shape: f32[8,128], index: 0, kind: input, shape index: {}]
  %s1 = inlined_call_operand.hbm [shape: f32[8,128], index: 1, kind: output, shape index: {}]
  %s2 = sld [smem:[#allocation0]]
  $region41: #{tpu_custom_call.1} parent=0
    _
  %s4 = ssub.s32 1, %s2
  %s5 = scalar_select 0, %s4, %s2
  $region1: #{tpu_custom_call.1} parent=0
    #allocation2 [shape = 'u8[4096]{0}', space=vmem, size = 0x1000, scoped, tag = 'input window, operand 0, single buffered']
    #allocation3 [shape = 's32[2]{0}', space=sflag, size = 0x8, scoped, tag = 'scoped memory for tpu_custom_call.1']
    #allocation4 [shape = 's32[2]{0}', space=sflag, size = 0x8, scoped, tag = 'scoped memory for tpu_custom_call.1']
    #allocation5 [shape = 'u8[4096]{0}', space=vmem, size = 0x1000, scoped, tag = 'output window, operand 0, single buffered']
    %6 = vsyncpa [#allocation3], 0
    %7 = vsyncpa [#allocation4], 0
    loop: start=0, step=1, limit=4
    $region2: #{tpu_custom_call.1} parent=1 // loop_pre_header
      _
    $region3: #{tpu_custom_call.1} parent=1 // loop_header
      %s9 = sphi 0, %s13
      %p10 = scmp.ge.s32.totalorder %s9, 4
      %s17 = sphi 0, %s17
      %s19 = sphi 0, %s17
      %s20 = sphi 0, %s19
      %s34 = sphi 0, %s20
      %s38 = sphi 0, %s38
      %s40 = sphi 0, %s38
      %s41 = sphi 0, %s40
      %s55 = sphi 0, %s41
    $region4: #{tpu_custom_call.1} parent=1 // loop_header_branch
      %12 = sbr.rel (%p10) target = $region8
    $region5: #{tpu_custom_call.1} parent=1 // loop_body
      %s14 = ssub.s32 %s9, 1
      %s15 = ssub.s32 %s9, 2
      %s16 = sadd.s32 %s9, 1
      %s18 = sadd.s32 %s17, 1
      %p21 = scmp.eq.s32.totalorder %s9, 1
      %p22 = scmp.ne.s32.totalorder %s17, %s19
      %p23 = scmp.eq.s32.totalorder %s9, 0
      %p24 = por %p22, %p23
      %p25 = scmp.ne.s32.totalorder %s17, %s19
      %p26 = scmp.eq.s32.totalorder %s14, 1
      %p27 = por %p25, %p26
      %p28 = scmp.ne.s32.totalorder %s19, %s20
      %p29 = scmp.eq.s32.totalorder %s14, 0
      %p30 = por %p28, %p29
      %p31 = scmp.ne.s32.totalorder %s19, %s20
      %p32 = scmp.eq.s32.totalorder %s15, 1
      %p33 = por %p31, %p32
      %p35 = scmp.ne.s32.totalorder %s20, %s34
      %p36 = scmp.eq.s32.totalorder %s15, 0
      %p37 = por %p35, %p36
      %s39 = sadd.s32 %s38, 1
      %p42 = scmp.eq.s32.totalorder %s9, 1
      %p43 = scmp.ne.s32.totalorder %s38, %s40
      %p44 = scmp.eq.s32.totalorder %s9, 0
      %p45 = por %p43, %p44
      %p46 = scmp.ne.s32.totalorder %s38, %s40
      %p47 = scmp.eq.s32.totalorder %s14, 1
      %p48 = por %p46, %p47
      %p49 = scmp.ne.s32.totalorder %s40, %s41
      %p50 = scmp.eq.s32.totalorder %s14, 0
      %p51 = por %p49, %p50
      %p52 = scmp.ne.s32.totalorder %s40, %s41
      %p53 = scmp.eq.s32.totalorder %s15, 1
      %p54 = por %p52, %p53
      %p56 = scmp.ne.s32.totalorder %s41, %s55
      %p57 = scmp.eq.s32.totalorder %s15, 0
      %p58 = por %p56, %p57
      %p59 = scmp.le.s32.totalorder 1, %s9
      %p60 = scmp.lt.s32.totalorder %s9, 3
      %p61 = pnand %p59, %p60
      %p62 = pneg %p61
      // Predicated region
      $region9: #{tpu_custom_call.1} parent=5 // pred_check
        _
      $region10: #{tpu_custom_call.1} parent=5 // pred_check_branch
        %64 = sbr.rel (%p61) target = $region12
      $region11: #{tpu_custom_call.1} parent=5 // pred_region
        %s65 = ssub.s32 %s9, 1
        // Predicated region
        $region13: #{tpu_custom_call.1} parent=11 // pred_check
          %p66 = pneg %p30
        $region14: #{tpu_custom_call.1} parent=11 // pred_check_branch
          %68 = sbr.rel (%p66) target = $region16
        $region15: #{tpu_custom_call.1} parent=11 // pred_region
          %s70 = ssub.s32 128, 128
          %71 = vsyncadd [#allocation3], %s70
          %s73 = sshll.u32 [#allocation2], 4
          %s74 = int_to_ptr.vmem [resolvable:$true] %s73
          %76 = dma.hbm_to_vmem [thread:$0]  %s0, 128, %s74, [#allocation3]
        $region16: #{tpu_custom_call.1} parent=11 // pred_fallthru
          _
      $region12: #{tpu_custom_call.1} parent=5 // pred_fallthru
        _
      %p77 = scmp.lt.s32.totalorder %s9, 2
      // Predicated region
      $region17: #{tpu_custom_call.1} parent=5 // pred_check
        %p78 = pneg %p77
      $region18: #{tpu_custom_call.1} parent=5 // pred_check_branch
        %80 = sbr.rel (%p78) target = $region20
      $region19: #{tpu_custom_call.1} parent=5 // pred_region
        _
      $region20: #{tpu_custom_call.1} parent=5 // pred_fallthru
        _
      %p81 = scmp.le.s32.totalorder 1, %s9
      %p82 = scmp.lt.s32.totalorder %s9, 3
      %p83 = pnand %p81, %p82
      %p84 = pneg %p83
      // Predicated region
      $region21: #{tpu_custom_call.1} parent=5 // pred_check
        _
      $region22: #{tpu_custom_call.1} parent=5 // pred_check_branch
        %86 = sbr.rel (%p83) target = $region24
      $region23: #{tpu_custom_call.1} parent=5 // pred_region
        %s87 = ssub.s32 %s9, 1
        // Predicated region
        $region25: #{tpu_custom_call.1} parent=23 // pred_check
          %p88 = pneg %p30
        $region26: #{tpu_custom_call.1} parent=23 // pred_check_branch
          %90 = sbr.rel (%p88) target = $region28
        $region27: #{tpu_custom_call.1} parent=23 // pred_region
          %91 = dma.done [#allocation3], 128
        $region28: #{tpu_custom_call.1} parent=23 // pred_fallthru
          _
        %p92 = pneg %p30
        %p93 = pneg %p27
        %p94 = pneg %p51
        %p95 = pneg %p48
        %v96 = vld [vmem:[#allocation2] sm:$0xff]
        %97 = vst [vmem:[#allocation5] sm:$0xff] %v96
        // Predicated region
        $region29: #{tpu_custom_call.1} parent=23 // pred_check
          %p98 = pneg %p48
        $region30: #{tpu_custom_call.1} parent=23 // pred_check_branch
          %100 = sbr.rel (%p98) target = $region32
        $region31: #{tpu_custom_call.1} parent=23 // pred_region
          %s102 = ssub.s32 128, 128
          %103 = vsyncadd [#allocation4], %s102
          %s105 = sshll.u32 [#allocation5], 4
          %s106 = int_to_ptr.vmem [resolvable:$true] %s105
          %108 = dma.vmem_to_hbm [thread:$0]  %s106, 128, %s1, [#allocation4]
        $region32: #{tpu_custom_call.1} parent=23 // pred_fallthru
          _
        // Predicated region
        $region33: #{tpu_custom_call.1} parent=23 // pred_check
          %p109 = pneg %p48
        $region34: #{tpu_custom_call.1} parent=23 // pred_check_branch
          %111 = sbr.rel (%p109) target = $region36
        $region35: #{tpu_custom_call.1} parent=23 // pred_region
          %112 = dma.done [#allocation4], 128
        $region36: #{tpu_custom_call.1} parent=23 // pred_fallthru
          _
      $region24: #{tpu_custom_call.1} parent=5 // pred_fallthru
        _
      %p113 = scmp.le.s32.totalorder 2, %s9
      // Predicated region
      $region37: #{tpu_custom_call.1} parent=5 // pred_check
        %p114 = pneg %p113
      $region38: #{tpu_custom_call.1} parent=5 // pred_check_branch
        %116 = sbr.rel (%p114) target = $region40
      $region39: #{tpu_custom_call.1} parent=5 // pred_region
        %s117 = ssub.s32 %s9, 2
      $region40: #{tpu_custom_call.1} parent=5 // pred_fallthru
        _
    $region6: #{tpu_custom_call.1} parent=1 // loop_footer
      %s13 = sadd.s32 1, %s9
    $region7: #{tpu_custom_call.1} parent=1 // loop_footer_branch
      %8 = sbr.rel target = $region3
    $region8: #{tpu_custom_call.1} parent=1 // loop_exit
      _
    %118 = vsyncpa [#allocation3], 1
    %s119 = scalar_lea.sflag [#allocation3], 1
    %120 = vsyncpa %s119, 1
    %121 = vsyncpa [#allocation4], 1
    %s122 = scalar_lea.sflag [#allocation4], 1
    %123 = vsyncpa %s122, 1

// kernel: _gru_cell_impl.1
$region0: #{_gru_cell_impl.1}
  #allocation0 [shape = 'u32[]', space=smem, size = 0x4, offset = 0x4, fixed_abs, tag = 'smem constant byte address 0x4 - core index']
  #allocation1 [shape = 'u32[144,128]{1,0:T(1,128)}', space=vmem, size = 0x12000, scoped, tag = 'internal scratch']
  %s0 = inlined_call_operand.vmem [shape: f32[8,128], index: 0, kind: input, shape index: {}]
  %s1 = inlined_call_operand.vmem [shape: f32[8,128], index: 1, kind: input, shape index: {}]
  %s2 = inlined_call_operand.hbm [shape: f32[128,384], index: 2, kind: input, shape index: {}]
  %s3 = inlined_call_operand.hbm [shape: f32[128,384], index: 3, kind: input, shape index: {}]
  %s4 = inlined_call_operand.vmem [shape: f32[1,384], index: 4, kind: input, shape index: {}]
  %s5 = inlined_call_operand.vmem [shape: f32[1,384], index: 5, kind: input, shape index: {}]
  %s6 = inlined_call_operand.vmem [shape: f32[8,128], index: 6, kind: output, shape index: {}]
  %s7 = sld [smem:[#allocation0]]
  $region42: #{_gru_cell_impl.1} parent=0
    _
  %s9 = ssub.s32 1, %s7
  %s10 = scalar_select 0, %s9, %s7
  $region1: #{_gru_cell_impl.1} parent=0
    #allocation2 [shape = 'u8[196608]{0}', space=vmem, size = 0x30000, scoped, tag = 'input window, operand 2, single buffered']
    #allocation3 [shape = 's32[1]{0}', space=sflag, size = 0x4, scoped, tag = 'scoped memory for _gru_cell_impl.1']
    #allocation4 [shape = 'u8[196608]{0}', space=vmem, size = 0x30000, scoped, tag = 'input window, operand 3, single buffered']
    #allocation5 [shape = 's32[1]{0}', space=sflag, size = 0x4, scoped, tag = 'scoped memory for _gru_cell_impl.1']
    %11 = vsyncpa [#allocation3], 0
    %12 = vsyncpa [#allocation5], 0
    // Predicated region
    $region2: #{_gru_cell_impl.1} parent=1 // pred_check
      _
    $region3: #{_gru_cell_impl.1} parent=1 // pred_check_branch
      %14 = sbr.rel (0) target = $region5
    $region4: #{_gru_cell_impl.1} parent=1 // pred_region
      _
    $region5: #{_gru_cell_impl.1} parent=1 // pred_fallthru
      _
    // Predicated region
    $region6: #{_gru_cell_impl.1} parent=1 // pred_check
      _
    $region7: #{_gru_cell_impl.1} parent=1 // pred_check_branch
      %16 = sbr.rel (0) target = $region9
    $region8: #{_gru_cell_impl.1} parent=1 // pred_region
      _
    $region9: #{_gru_cell_impl.1} parent=1 // pred_fallthru
      _
    // Predicated region
    $region10: #{_gru_cell_impl.1} parent=1 // pred_check
      _
    $region11: #{_gru_cell_impl.1} parent=1 // pred_check_branch
      %18 = sbr.rel (0) target = $region13
    $region12: #{_gru_cell_impl.1} parent=1 // pred_region
      %s20 = ssub.s32 6144, 6144
      %21 = vsyncadd [#allocation3], %s20
      %s22 = sshll.u32 [#allocation2], 4
      %s23 = int_to_ptr.vmem [resolvable:$true] %s22
      %28 = dma.hbm_to_vmem [thread:$0]  %s2, 6144, %s23, [#allocation3], 384, 384, 24
    $region13: #{_gru_cell_impl.1} parent=1 // pred_fallthru
      _
    // Predicated region
    $region14: #{_gru_cell_impl.1} parent=1 // pred_check
      _
    $region15: #{_gru_cell_impl.1} parent=1 // pred_check_branch
      %30 = sbr.rel (0) target = $region17
    $region16: #{_gru_cell_impl.1} parent=1 // pred_region
      %s32 = ssub.s32 6144, 6144
      %33 = vsyncadd [#allocation5], %s32
      %s34 = sshll.u32 [#allocation4], 4
      %s35 = int_to_ptr.vmem [resolvable:$true] %s34
      %40 = dma.hbm_to_vmem [thread:$0]  %s3, 6144, %s35, [#allocation5], 384, 384, 24
    $region17: #{_gru_cell_impl.1} parent=1 // pred_fallthru
      _
    // Predicated region
    $region18: #{_gru_cell_impl.1} parent=1 // pred_check
      _
    $region19: #{_gru_cell_impl.1} parent=1 // pred_check_branch
      %42 = sbr.rel (0) target = $region21
    $region20: #{_gru_cell_impl.1} parent=1 // pred_region
      _
    $region21: #{_gru_cell_impl.1} parent=1 // pred_fallthru
      _
    // Predicated region
    $region22: #{_gru_cell_impl.1} parent=1 // pred_check
      _
    $region23: #{_gru_cell_impl.1} parent=1 // pred_check_branch
      %44 = sbr.rel (0) target = $region25
    $region24: #{_gru_cell_impl.1} parent=1 // pred_region
      _
    $region25: #{_gru_cell_impl.1} parent=1 // pred_fallthru
      _
    // Predicated region
    $region26: #{_gru_cell_impl.1} parent=1 // pred_check
      _
    $region27: #{_gru_cell_impl.1} parent=1 // pred_check_branch
      %46 = sbr.rel (0) target = $region29
    $region28: #{_gru_cell_impl.1} parent=1 // pred_region
      %47 = dma.done [#allocation3], 6144
    $region29: #{_gru_cell_impl.1} parent=1 // pred_fallthru
      _
    // Predicated region
    $region30: #{_gru_cell_impl.1} parent=1 // pred_check
      _
    $region31: #{_gru_cell_impl.1} parent=1 // pred_check_branch
      %49 = sbr.rel (0) target = $region33
    $region32: #{_gru_cell_impl.1} parent=1 // pred_region
      %50 = dma.done [#allocation5], 6144
    $region33: #{_gru_cell_impl.1} parent=1 // pred_fallthru
      _
    %v51 = vld [vmem:[%s0] sm:$0xff]
    %v52 = vld [vmem:[#allocation2] sm:$0xff]
    %v53 = vld [vmem:[#allocation2 + $0x8] sm:$0xff]
    %v54 = vld [vmem:[#allocation2 + $0x10] sm:$0xff]
    %v55 = vld [vmem:[#allocation2 + $0x18] sm:$0xff]
    %v56 = vld [vmem:[#allocation2 + $0x20] sm:$0xff]
    %v57 = vld [vmem:[#allocation2 + $0x28] sm:$0xff]
    %v58 = vld [vmem:[#allocation2 + $0x30] sm:$0xff]
    %v59 = vld [vmem:[#allocation2 + $0x38] sm:$0xff]
    %v60 = vld [vmem:[#allocation2 + $0x40] sm:$0xff]
    %v61 = vld [vmem:[#allocation2 + $0x48] sm:$0xff]
    %v62 = vld [vmem:[#allocation2 + $0x50] sm:$0xff]
    %v63 = vld [vmem:[#allocation2 + $0x58] sm:$0xff]
    %v64 = vld [vmem:[#allocation2 + $0x60] sm:$0xff]
    %v65 = vld [vmem:[#allocation2 + $0x68] sm:$0xff]
    %v66 = vld [vmem:[#allocation2 + $0x70] sm:$0xff]
    %v67 = vld [vmem:[#allocation2 + $0x78] sm:$0xff]
    %v68 = vld [vmem:[#allocation2 + $0x80] sm:$0xff]
    %v69 = vld [vmem:[#allocation2 + $0x88] sm:$0xff]
    %v70 = vld [vmem:[#allocation2 + $0x90] sm:$0xff]
    %v71 = vld [vmem:[#allocation2 + $0x98] sm:$0xff]
    %v72 = vld [vmem:[#allocation2 + $0xa0] sm:$0xff]
    %v73 = vld [vmem:[#allocation2 + $0xa8] sm:$0xff]
    %v74 = vld [vmem:[#allocation2 + $0xb0] sm:$0xff]
    %v75 = vld [vmem:[#allocation2 + $0xb8] sm:$0xff]
    %v76 = vld [vmem:[#allocation2 + $0xc0] sm:$0xff]
    %v77 = vld [vmem:[#allocation2 + $0xc8] sm:$0xff]
    %v78 = vld [vmem:[#allocation2 + $0xd0] sm:$0xff]
    %v79 = vld [vmem:[#allocation2 + $0xd8] sm:$0xff]
    %v80 = vld [vmem:[#allocation2 + $0xe0] sm:$0xff]
    %v81 = vld [vmem:[#allocation2 + $0xe8] sm:$0xff]
    %v82 = vld [vmem:[#allocation2 + $0xf0] sm:$0xff]
    %v83 = vld [vmem:[#allocation2 + $0xf8] sm:$0xff]
    %v84 = vld [vmem:[#allocation2 + $0x100] sm:$0xff]
    %v85 = vld [vmem:[#allocation2 + $0x108] sm:$0xff]
    %v86 = vld [vmem:[#allocation2 + $0x110] sm:$0xff]
    %v87 = vld [vmem:[#allocation2 + $0x118] sm:$0xff]
    %v88 = vld [vmem:[#allocation2 + $0x120] sm:$0xff]
    %v89 = vld [vmem:[#allocation2 + $0x128] sm:$0xff]
    %v90 = vld [vmem:[#allocation2 + $0x130] sm:$0xff]
    %v91 = vld [vmem:[#allocation2 + $0x138] sm:$0xff]
    %v92 = vld [vmem:[#allocation2 + $0x140] sm:$0xff]
    %v93 = vld [vmem:[#allocation2 + $0x148] sm:$0xff]
    %v94 = vld [vmem:[#allocation2 + $0x150] sm:$0xff]
    %v95 = vld [vmem:[#allocation2 + $0x158] sm:$0xff]
    %v96 = vld [vmem:[#allocation2 + $0x160] sm:$0xff]
    %v97 = vld [vmem:[#allocation2 + $0x168] sm:$0xff]
    %v98 = vld [vmem:[#allocation2 + $0x170] sm:$0xff]
    %v99 = vld [vmem:[#allocation2 + $0x178] sm:$0xff]
    %v100 = vld [vmem:[%s4] sm:$0x7]
    %v102 = vlaneseq
    %v103 = vshrl.u32 %v102, 7
    %v104 = vsub.s32 0, %v103
    %v105 = vrot.slane %v100, %v104
    %v106 = vlaneseq
    %v107 = vshrl.u32 %v106, 7
    %v108 = vsub.s32 1, %v107
    %v109 = vrot.slane %v100, %v108
    %v110 = vlaneseq
    %v111 = vshrl.u32 %v110, 7
    %v112 = vsub.s32 2, %v111
    %v113 = vrot.slane %v100, %v112
    %117 = vmatprep.subr.mxu0 %v98
    %118 = vmatpush1.msra.mxu0 %v97
    %119 = vmatprep.subr.mxu0 %v95
    %120 = vmatpush1.msra.mxu0 %v94
    %121 = vmatprep.subr.mxu0 %v92
    %122 = vmatpush1.msra.mxu0 %v91
    %123 = vmatprep.subr.mxu0 %v89
    %124 = vmatpush1.msra.mxu0 %v88
    %125 = vmatprep.subr.mxu0 %v86
    %126 = vmatpush1.msra.mxu0 %v85
    %127 = vmatprep.subr.mxu0 %v83
    %128 = vmatpush1.msra.mxu0 %v82
    %129 = vmatprep.subr.mxu0 %v80
    %130 = vmatpush1.msra.mxu0 %v79
    %131 = vmatprep.subr.mxu0 %v77
    %132 = vmatpush1.msra.mxu0 %v76
    %133 = vmatprep.subr.mxu0 %v74
    %134 = vmatpush1.msra.mxu0 %v73
    %135 = vmatprep.subr.mxu0 %v71
    %136 = vmatpush1.msra.mxu0 %v70
    %137 = vmatprep.subr.mxu0 %v68
    %138 = vmatpush1.msra.mxu0 %v67
    %139 = vmatprep.subr.mxu0 %v65
    %140 = vmatpush1.msra.mxu0 %v64
    %141 = vmatprep.subr.mxu0 %v62
    %142 = vmatpush1.msra.mxu0 %v61
    %143 = vmatprep.subr.mxu0 %v59
    %144 = vmatpush1.msra.mxu0 %v58
    %145 = vmatprep.subr.mxu0 %v56
    %146 = vmatpush1.msra.mxu0 %v55
    %147 = vmatprep.subr.mxu0 %v53
    %148 = vmatpush1.msra.mxu0 %v52
    %149 = vmatprep.subr.mxu0 0.0
    %150 = vmatpush2.msra.mxu0 0.0
    %151 = vmatprep.subr.mxu0 0.0
    %152 = vmatpush2.msra.mxu0 0.0
    %153 = vmatprep.subr.mxu0 0.0
    %154 = vmatpush2.msra.mxu0 0.0
    %155 = vmatprep.subr.mxu0 0.0
    %156 = vmatpush2.msra.mxu0 0.0
    %157 = vmatprep.subr.mxu0 0.0
    %158 = vmatpush2.msra.mxu0 0.0
    %159 = vmatprep.subr.mxu0 0.0
    %160 = vmatpush2.msra.mxu0 0.0
    %161 = vmatprep.subr.mxu0 0.0
    %162 = vmatpush2.msra.mxu0 0.0
    %163 = vmatprep.subr.mxu0 0.0
    %164 = vmatpush2.msra.mxu0 0.0
    %165 = vmatprep.subr.mxu0 0.0
    %166 = vmatpush2.msra.mxu0 0.0
    %167 = vmatprep.subr.mxu0 0.0
    %168 = vmatpush2.msra.mxu0 0.0
    %169 = vmatprep.subr.mxu0 0.0
    %170 = vmatpush2.msra.mxu0 0.0
    %171 = vmatprep.subr.mxu0 0.0
    %172 = vmatpush2.msra.mxu0 0.0
    %173 = vmatprep.subr.mxu0 0.0
    %174 = vmatpush2.msra.mxu0 0.0
    %175 = vmatprep.subr.mxu0 0.0
    %176 = vmatpush2.msra.mxu0 0.0
    %177 = vmatprep.subr.mxu0 0.0
    %178 = vmatpush2.msra.mxu0 0.0
    %179 = vmatprep.subr.mxu0 0.0
    %180 = vmatpush2.msra.mxu0 0.0
    %181 = vmatprep.mubr.f32.mxu0 0.0
    %182 = vmatmul.mubr.f32.gmra.mxu0 %v51
    %v183 = vpop.f32.mrf.mxu0
    %v184 = vadd.f32 %v105, %v183
    %v185 = vpop.f32.mrf.mxu0
    %v186 = vadd.f32 %v109, %v185
    %187 = vdwg.mxu0
    %188 = vmatprep.subr.mxu0 0.0
    %189 = vmatpush1.msra.mxu0 %v99
    %190 = vmatprep.subr.mxu0 0.0
    %191 = vmatpush1.msra.mxu0 %v96
    %192 = vmatprep.subr.mxu0 0.0
    %193 = vmatpush1.msra.mxu0 %v93
    %194 = vmatprep.subr.mxu0 0.0
    %195 = vmatpush1.msra.mxu0 %v90
    %196 = vmatprep.subr.mxu0 0.0
    %197 = vmatpush1.msra.mxu0 %v87
    %198 = vmatprep.subr.mxu0 0.0
    %199 = vmatpush1.msra.mxu0 %v84
    %200 = vmatprep.subr.mxu0 0.0
    %201 = vmatpush1.msra.mxu0 %v81
    %202 = vmatprep.subr.mxu0 0.0
    %203 = vmatpush1.msra.mxu0 %v78
    %204 = vmatprep.subr.mxu0 0.0
    %205 = vmatpush1.msra.mxu0 %v75
    %206 = vmatprep.subr.mxu0 0.0
    %207 = vmatpush1.msra.mxu0 %v72
    %208 = vmatprep.subr.mxu0 0.0
    %209 = vmatpush1.msra.mxu0 %v69
    %210 = vmatprep.subr.mxu0 0.0
    %211 = vmatpush1.msra.mxu0 %v66
    %212 = vmatprep.subr.mxu0 0.0
    %213 = vmatpush1.msra.mxu0 %v63
    %214 = vmatprep.subr.mxu0 0.0
    %215 = vmatpush1.msra.mxu0 %v60
    %216 = vmatprep.subr.mxu0 0.0
    %217 = vmatpush1.msra.mxu0 %v57
    %218 = vmatprep.subr.mxu0 0.0
    %219 = vmatpush1.msra.mxu0 %v54
    %220 = vmatprep.subr.mxu0 0.0
    %221 = vmatpush2.msra.mxu0 0.0
    %222 = vmatprep.subr.mxu0 0.0
    %223 = vmatpush2.msra.mxu0 0.0
    %224 = vmatprep.subr.mxu0 0.0
    %225 = vmatpush2.msra.mxu0 0.0
    %226 = vmatprep.subr.mxu0 0.0
    %227 = vmatpush2.msra.mxu0 0.0
    %228 = vmatprep.subr.mxu0 0.0
    %229 = vmatpush2.msra.mxu0 0.0
    %230 = vmatprep.subr.mxu0 0.0
    %231 = vmatpush2.msra.mxu0 0.0
    %232 = vmatprep.subr.mxu0 0.0
    %233 = vmatpush2.msra.mxu0 0.0
    %234 = vmatprep.subr.mxu0 0.0
    %235 = vmatpush2.msra.mxu0 0.0
    %236 = vmatprep.subr.mxu0 0.0
    %237 = vmatpush2.msra.mxu0 0.0
    %238 = vmatprep.subr.mxu0 0.0
    %239 = vmatpush2.msra.mxu0 0.0
    %240 = vmatprep.subr.mxu0 0.0
    %241 = vmatpush2.msra.mxu0 0.0
    %242 = vmatprep.subr.mxu0 0.0
    %243 = vmatpush2.msra.mxu0 0.0
    %244 = vmatprep.subr.mxu0 0.0
    %245 = vmatpush2.msra.mxu0 0.0
    %246 = vmatprep.subr.mxu0 0.0
    %247 = vmatpush2.msra.mxu0 0.0
    %248 = vmatprep.subr.mxu0 0.0
    %249 = vmatpush2.msra.mxu0 0.0
    %250 = vmatprep.subr.mxu0 0.0
    %251 = vmatpush2.msra.mxu0 0.0
    %252 = vmatprep.mubr.f32.mxu0 0.0
    %253 = vmatmul.mubr.f32.gmra.mxu0 %v51
    %v254 = vpop.f32.mrf.mxu0
    %v255 = vadd.f32 %v113, %v254
    %v256 = vpop.f32.mrf.mxu0
    %257 = vdwg.mxu0
    %v258 = vld [vmem:[%s1] sm:$0xff]
    %v259 = vld [vmem:[#allocation4] sm:$0xff]
    %v260 = vld [vmem:[#allocation4 + $0x8] sm:$0xff]
    %v261 = vld [vmem:[#allocation4 + $0x10] sm:$0xff]
    %v262 = vld [vmem:[#allocation4 + $0x18] sm:$0xff]
    %v263 = vld [vmem:[#allocation4 + $0x20] sm:$0xff]
    %v264 = vld [vmem:[#allocation4 + $0x28] sm:$0xff]
    %v265 = vld [vmem:[#allocation4 + $0x30] sm:$0xff]
    %v266 = vld [vmem:[#allocation4 + $0x38] sm:$0xff]
    %v267 = vld [vmem:[#allocation4 + $0x40] sm:$0xff]
    %v268 = vld [vmem:[#allocation4 + $0x48] sm:$0xff]
    %v269 = vld [vmem:[#allocation4 + $0x50] sm:$0xff]
    %v270 = vld [vmem:[#allocation4 + $0x58] sm:$0xff]
    %v271 = vld [vmem:[#allocation4 + $0x60] sm:$0xff]
    %v272 = vld [vmem:[#allocation4 + $0x68] sm:$0xff]
    %v273 = vld [vmem:[#allocation4 + $0x70] sm:$0xff]
    %v274 = vld [vmem:[#allocation4 + $0x78] sm:$0xff]
    %v275 = vld [vmem:[#allocation4 + $0x80] sm:$0xff]
    %v276 = vld [vmem:[#allocation4 + $0x88] sm:$0xff]
    %v277 = vld [vmem:[#allocation4 + $0x90] sm:$0xff]
    %v278 = vld [vmem:[#allocation4 + $0x98] sm:$0xff]
    %v279 = vld [vmem:[#allocation4 + $0xa0] sm:$0xff]
    %v280 = vld [vmem:[#allocation4 + $0xa8] sm:$0xff]
    %v281 = vld [vmem:[#allocation4 + $0xb0] sm:$0xff]
    %v282 = vld [vmem:[#allocation4 + $0xb8] sm:$0xff]
    %v283 = vld [vmem:[#allocation4 + $0xc0] sm:$0xff]
    %v284 = vld [vmem:[#allocation4 + $0xc8] sm:$0xff]
    %v285 = vld [vmem:[#allocation4 + $0xd0] sm:$0xff]
    %v286 = vld [vmem:[#allocation4 + $0xd8] sm:$0xff]
    %v287 = vld [vmem:[#allocation4 + $0xe0] sm:$0xff]
    %v288 = vld [vmem:[#allocation4 + $0xe8] sm:$0xff]
    %v289 = vld [vmem:[#allocation4 + $0xf0] sm:$0xff]
    %v290 = vld [vmem:[#allocation4 + $0xf8] sm:$0xff]
    %v291 = vld [vmem:[#allocation4 + $0x100] sm:$0xff]
    %v292 = vld [vmem:[#allocation4 + $0x108] sm:$0xff]
    %v293 = vld [vmem:[#allocation4 + $0x110] sm:$0xff]
    %v294 = vld [vmem:[#allocation4 + $0x118] sm:$0xff]
    %v295 = vld [vmem:[#allocation4 + $0x120] sm:$0xff]
    %v296 = vld [vmem:[#allocation4 + $0x128] sm:$0xff]
    %v297 = vld [vmem:[#allocation4 + $0x130] sm:$0xff]
    %v298 = vld [vmem:[#allocation4 + $0x138] sm:$0xff]
    %v299 = vld [vmem:[#allocation4 + $0x140] sm:$0xff]
    %v300 = vld [vmem:[#allocation4 + $0x148] sm:$0xff]
    %v301 = vld [vmem:[#allocation4 + $0x150] sm:$0xff]
    %v302 = vld [vmem:[#allocation4 + $0x158] sm:$0xff]
    %v303 = vld [vmem:[#allocation4 + $0x160] sm:$0xff]
    %v304 = vld [vmem:[#allocation4 + $0x168] sm:$0xff]
    %v305 = vld [vmem:[#allocation4 + $0x170] sm:$0xff]
    %v306 = vld [vmem:[#allocation4 + $0x178] sm:$0xff]
    %v307 = vld [vmem:[%s5] sm:$0x7]
    %v309 = vlaneseq
    %v310 = vshrl.u32 %v309, 7
    %v311 = vsub.s32 0, %v310
    %v312 = vrot.slane %v307, %v311
    %v313 = vlaneseq
    %v314 = vshrl.u32 %v313, 7
    %v315 = vsub.s32 1, %v314
    %v316 = vrot.slane %v307, %v315
    %v317 = vlaneseq
    %v318 = vshrl.u32 %v317, 7
    %v319 = vsub.s32 2, %v318
    %v320 = vrot.slane %v307, %v319
    %324 = vmatprep.subr.mxu0 %v305
    %325 = vmatpush1.msra.mxu0 %v304
    %326 = vmatprep.subr.mxu0 %v302
    %327 = vmatpush1.msra.mxu0 %v301
    %328 = vmatprep.subr.mxu0 %v299
    %329 = vmatpush1.msra.mxu0 %v298
    %330 = vmatprep.subr.mxu0 %v296
    %331 = vmatpush1.msra.mxu0 %v295
    %332 = vmatprep.subr.mxu0 %v293
    %333 = vmatpush1.msra.mxu0 %v292
    %334 = vmatprep.subr.mxu0 %v290
    %335 = vmatpush1.msra.mxu0 %v289
    %336 = vmatprep.subr.mxu0 %v287
    %337 = vmatpush1.msra.mxu0 %v286
    %338 = vmatprep.subr.mxu0 %v284
    %339 = vmatpush1.msra.mxu0 %v283
    %340 = vmatprep.subr.mxu0 %v281
    %341 = vmatpush1.msra.mxu0 %v280
    %342 = vmatprep.subr.mxu0 %v278
    %343 = vmatpush1.msra.mxu0 %v277
    %344 = vmatprep.subr.mxu0 %v275
    %345 = vmatpush1.msra.mxu0 %v274
    %346 = vmatprep.subr.mxu0 %v272
    %347 = vmatpush1.msra.mxu0 %v271
    %348 = vmatprep.subr.mxu0 %v269
    %349 = vmatpush1.msra.mxu0 %v268
    %350 = vmatprep.subr.mxu0 %v266
    %351 = vmatpush1.msra.mxu0 %v265
    %352 = vmatprep.subr.mxu0 %v263
    %353 = vmatpush1.msra.mxu0 %v262
    %354 = vmatprep.subr.mxu0 %v260
    %355 = vmatpush1.msra.mxu0 %v259
    %356 = vmatprep.subr.mxu0 0.0
    %357 = vmatpush2.msra.mxu0 0.0
    %358 = vmatprep.subr.mxu0 0.0
    %359 = vmatpush2.msra.mxu0 0.0
    %360 = vmatprep.subr.mxu0 0.0
    %361 = vmatpush2.msra.mxu0 0.0
    %362 = vmatprep.subr.mxu0 0.0
    %363 = vmatpush2.msra.mxu0 0.0
    %364 = vmatprep.subr.mxu0 0.0
    %365 = vmatpush2.msra.mxu0 0.0
    %366 = vmatprep.subr.mxu0 0.0
    %367 = vmatpush2.msra.mxu0 0.0
    %368 = vmatprep.subr.mxu0 0.0
    %369 = vmatpush2.msra.mxu0 0.0
    %370 = vmatprep.subr.mxu0 0.0
    %371 = vmatpush2.msra.mxu0 0.0
    %372 = vmatprep.subr.mxu0 0.0
    %373 = vmatpush2.msra.mxu0 0.0
    %374 = vmatprep.subr.mxu0 0.0
    %375 = vmatpush2.msra.mxu0 0.0
    %376 = vmatprep.subr.mxu0 0.0
    %377 = vmatpush2.msra.mxu0 0.0
    %378 = vmatprep.subr.mxu0 0.0
    %379 = vmatpush2.msra.mxu0 0.0
    %380 = vmatprep.subr.mxu0 0.0
    %381 = vmatpush2.msra.mxu0 0.0
    %382 = vmatprep.subr.mxu0 0.0
    %383 = vmatpush2.msra.mxu0 0.0
    %384 = vmatprep.subr.mxu0 0.0
    %385 = vmatpush2.msra.mxu0 0.0
    %386 = vmatprep.subr.mxu0 0.0
    %387 = vmatpush2.msra.mxu0 0.0
    %388 = vmatprep.mubr.f32.mxu0 0.0
    %389 = vmatmul.mubr.f32.gmra.mxu0 %v258
    %v390 = vpop.f32.mrf.mxu0
    %v391 = vadd.f32 %v312, %v390
    %v392 = vpop.f32.mrf.mxu0
    %v393 = vadd.f32 %v316, %v392
    %394 = vdwg.mxu0
    %395 = vmatprep.subr.mxu0 0.0
    %396 = vmatpush1.msra.mxu0 %v306
    %397 = vmatprep.subr.mxu0 0.0
    %398 = vmatpush1.msra.mxu0 %v303
    %399 = vmatprep.subr.mxu0 0.0
    %400 = vmatpush1.msra.mxu0 %v300
    %401 = vmatprep.subr.mxu0 0.0
    %402 = vmatpush1.msra.mxu0 %v297
    %403 = vmatprep.subr.mxu0 0.0
    %404 = vmatpush1.msra.mxu0 %v294
    %405 = vmatprep.subr.mxu0 0.0
    %406 = vmatpush1.msra.mxu0 %v291
    %407 = vmatprep.subr.mxu0 0.0
    %408 = vmatpush1.msra.mxu0 %v288
    %409 = vmatprep.subr.mxu0 0.0
    %410 = vmatpush1.msra.mxu0 %v285
    %411 = vmatprep.subr.mxu0 0.0
    %412 = vmatpush1.msra.mxu0 %v282
    %413 = vmatprep.subr.mxu0 0.0
    %414 = vmatpush1.msra.mxu0 %v279
    %415 = vmatprep.subr.mxu0 0.0
    %416 = vmatpush1.msra.mxu0 %v276
    %417 = vmatprep.subr.mxu0 0.0
    %418 = vmatpush1.msra.mxu0 %v273
    %419 = vmatprep.subr.mxu0 0.0
    %420 = vmatpush1.msra.mxu0 %v270
    %421 = vmatprep.subr.mxu0 0.0
    %422 = vmatpush1.msra.mxu0 %v267
    %423 = vmatprep.subr.mxu0 0.0
    %424 = vmatpush1.msra.mxu0 %v264
    %425 = vmatprep.subr.mxu0 0.0
    %426 = vmatpush1.msra.mxu0 %v261
    %427 = vmatprep.subr.mxu0 0.0
    %428 = vmatpush2.msra.mxu0 0.0
    %429 = vmatprep.subr.mxu0 0.0
    %430 = vmatpush2.msra.mxu0 0.0
    %431 = vmatprep.subr.mxu0 0.0
    %432 = vmatpush2.msra.mxu0 0.0
    %433 = vmatprep.subr.mxu0 0.0
    %434 = vmatpush2.msra.mxu0 0.0
    %435 = vmatprep.subr.mxu0 0.0
    %436 = vmatpush2.msra.mxu0 0.0
    %437 = vmatprep.subr.mxu0 0.0
    %438 = vmatpush2.msra.mxu0 0.0
    %439 = vmatprep.subr.mxu0 0.0
    %440 = vmatpush2.msra.mxu0 0.0
    %441 = vmatprep.subr.mxu0 0.0
    %442 = vmatpush2.msra.mxu0 0.0
    %443 = vmatprep.subr.mxu0 0.0
    %444 = vmatpush2.msra.mxu0 0.0
    %445 = vmatprep.subr.mxu0 0.0
    %446 = vmatpush2.msra.mxu0 0.0
    %447 = vmatprep.subr.mxu0 0.0
    %448 = vmatpush2.msra.mxu0 0.0
    %449 = vmatprep.subr.mxu0 0.0
    %450 = vmatpush2.msra.mxu0 0.0
    %451 = vmatprep.subr.mxu0 0.0
    %452 = vmatpush2.msra.mxu0 0.0
    %453 = vmatprep.subr.mxu0 0.0
    %454 = vmatpush2.msra.mxu0 0.0
    %455 = vmatprep.subr.mxu0 0.0
    %456 = vmatpush2.msra.mxu0 0.0
    %457 = vmatprep.subr.mxu0 0.0
    %458 = vmatpush2.msra.mxu0 0.0
    %459 = vmatprep.mubr.f32.mxu0 0.0
    %460 = vmatmul.mubr.f32.gmra.mxu0 %v258
    %v461 = vpop.f32.mrf.mxu0
    %v462 = vadd.f32 %v320, %v461
    %v463 = vpop.f32.mrf.mxu0
    %464 = vdwg.mxu0
    %v465 = vadd.f32 %v184, %v391
    %v466 = vxor.u32 %v465, 2147483648
    %v467 = vmul.f32 %v466, 1.442695
    %v468 = vpow.pop %v467
    %v469 = vadd.f32 %v468, 1.0
    %v470 = vrcp.pop %v469
    %v471 = vmul.f32 1.0, %v470
    %v472 = vadd.f32 %v186, %v393
    %v473 = vxor.u32 %v472, 2147483648
    %v474 = vmul.f32 %v473, 1.442695
    %v475 = vpow.pop %v474
    %v476 = vadd.f32 %v475, 1.0
    %v477 = vrcp.pop %v476
    %v478 = vmul.f32 1.0, %v477
    %v479 = vmul.f32 %v471, %v462
    %v480 = vadd.f32 %v255, %v479
    %v481 = vtanh.pop %v480
    %v482 = vsub.f32 %v258, %v481
    %v483 = vmul.f32 %v478, %v482
    %v484 = vadd.f32 %v481, %v483
    %485 = vst [vmem:[%s6] sm:$0xff] %v484
    // Predicated region
    $region34: #{_gru_cell_impl.1} parent=1 // pred_check
      _
    $region35: #{_gru_cell_impl.1} parent=1 // pred_check_branch
      %487 = sbr.rel (0) target = $region37
    $region36: #{_gru_cell_impl.1} parent=1 // pred_region
      _
    $region37: #{_gru_cell_impl.1} parent=1 // pred_fallthru
      _
    // Predicated region
    $region38: #{_gru_cell_impl.1} parent=1 // pred_check
      _
    $region39: #{_gru_cell_impl.1} parent=1 // pred_check_branch
      %489 = sbr.rel (0) target = $region41
    $region40: #{_gru_cell_impl.1} parent=1 // pred_region
      _
    $region41: #{_gru_cell_impl.1} parent=1 // pred_fallthru
      _
    %490 = vsyncpa [#allocation3], 1
    %491 = vsyncpa [#allocation5], 1

</llo_original>
